<compile_context>
chip_gen: v6e
topology: v6e:2x2x1
jax: 0.10.0
libtpu: 0.0.40
codegen_flags: <defaults>
</compile_context>

<pallas_src>
import jax
import jax.numpy as jnp
from jax import lax
from jax.experimental import pallas as pl
from jax.experimental.pallas import tpu as pltpu


# --------------------------------------------------------------------------
# Kernel: K-loop x edge-tile loop; out^T (+ mask row) resident in VMEM.
# --------------------------------------------------------------------------
def swe_gnn_kernel(
    init_ref,        # [D+1, N] f32  : [ (x_t @ Wf0)^T ; zeros ]   (read once)
    from_ref,        # [1, Et]  i32  : source node per edge
    to_ref,          # [1, Et]  i32  : destination node per edge
    static_ref,      # [2S+F, Et] bf16 : [xs_from ; xs_to ; e_attr]^T
    w1s_ref,         # [H, 2S+F] bf16 : W1 rows for the static operand, transposed
    w1f_ref,         # [H, D]   bf16 : W1 rows for out[from], transposed
    w1t_ref,         # [H, D]   bf16 : W1 rows for out[to], transposed
    b1_ref,          # [H, 1]   f32
    w2_ref,          # [D, H]   bf16 : W2^T
    b2_ref,          # [D, 1]   f32
    wf_ref,          # [D, D]   bf16 : filter_matrix[k+1]^T  (per-K block)
    alpha_ref,       # (1, 1)   f32  SMEM : PReLU slope
    o_ref,           # [D+1, N] f32  : rows 0..D-1 = out^T, row D = node mask
    scat_ref,        # [D, N]   f32  : per-K scatter accumulator (scratch)
):
    k = pl.program_id(0)
    e = pl.program_id(1)
    d = o_ref.shape[0] - 1
    n = o_ref.shape[1]
    et = from_ref.shape[1]
    bf = jnp.bfloat16

    # ---- k == 0: load the wrapper-computed f32 init (out0^T + zero mask row)
    @pl.when(jnp.logical_and(k == 0, e == 0))
    def _init():
        o_ref[...] = init_ref[...]

    # ---- start of each K step: refresh node mask row, zero the scatter accum
    @pl.when(e == 0)
    def _start_k():
        row_sum = jnp.sum(o_ref[pl.ds(0, d), :], axis=0, keepdims=True)   # f32, exact
        o_ref[pl.ds(d, 1), :] = (row_sum != 0.0).astype(jnp.float32)
        scat_ref[...] = jnp.zeros_like(scat_ref)

    # ---- one stacked gather matmul: out rows + mask for both edge endpoints
    idx = jnp.concatenate([from_ref[...], to_ref[...]], axis=1)           # [1, 2Et] i32
    node_iota = lax.broadcasted_iota(jnp.int32, (n, 2 * et), 0)
    onehot = (node_iota == idx).astype(bf)                                # [N, 2Et] bf16
    gath = jnp.dot(o_ref[...].astype(bf), onehot,
                   preferred_element_type=jnp.float32)                    # [D+1, 2Et]
    of_t = gath[:d, :et]          # out[from]^T  [D, Et]
    ot_t = gath[:d, et:]          # out[to]^T    [D, Et]
    m_f = gath[d:, :et]           # gathered node mask (exact 0/1)  [1, Et]
    m_t = gath[d:, et:]           # gathered node mask (exact 0/1)  [1, Et]

    # ---- edge MLP (feature-major; edges on lanes)
    h = jnp.dot(w1s_ref[...], static_ref[...], preferred_element_type=jnp.float32)
    h += jnp.dot(w1f_ref[...], of_t.astype(bf), preferred_element_type=jnp.float32)
    h += jnp.dot(w1t_ref[...], ot_t.astype(bf), preferred_element_type=jnp.float32)
    h += b1_ref[...]
    alpha = alpha_ref[0, 0]
    h = jnp.where(h >= 0.0, h, alpha * h)                                 # PReLU
    w_t = jnp.dot(w2_ref[...], h.astype(bf), preferred_element_type=jnp.float32)
    w_t += b2_ref[...]                                                    # [D, Et]

    # ---- row-wise L2 normalize + edge mask; masked / zero-norm edges -> exact 0
    nrm2 = jnp.sum(w_t * w_t, axis=0, keepdims=True)                      # [1, Et]
    live = jnp.logical_and(nrm2 > 0.0, (m_f + m_t) > 0.0)
    scale = jnp.where(live, lax.rsqrt(nrm2), 0.0)
    shift = (ot_t - of_t) * w_t * scale                                   # [D, Et]

    # ---- scatter_add(shift, to_node): one bf16 NT matmul, f32 accumulation
    onehot_to = onehot[:, et:]                                            # [N, Et]
    scat_ref[...] += lax.dot_general(
        shift.astype(bf), onehot_to,
        dimension_numbers=(((1,), (1,)), ((), ())),
        preferred_element_type=jnp.float32)                               # [D, N]

    # ---- end of K step: out^T += filter[k+1]^T @ scattered^T
    @pl.when(e == pl.num_programs(1) - 1)
    def _finish_k():
        upd = jnp.dot(wf_ref[...], scat_ref[...].astype(bf),
                      preferred_element_type=jnp.float32)                 # [D, N]
        o_ref[pl.ds(0, d), :] = o_ref[pl.ds(0, d), :] + upd


# --------------------------------------------------------------------------
# Sizing helpers (generation-aware)
# --------------------------------------------------------------------------
def _derive_edge_tile(num_edges, num_nodes, onehot_budget_bytes):
    """Edge tile is the lane axis -> multiple of 128 (or the full edge count)."""
    if num_edges % 128 != 0:
        return num_edges                      # single full tile (block == full dim)
    # one-hot path per edge column: i32 iota (4B) + bf16 one-hot (2B), 2 halves.
    per_edge = 12 * max(num_nodes, 1)
    et = int(onehot_budget_bytes // per_edge)
    et = min(max(et, 128), 2048, num_edges)
    et -= et % 128
    et = max(et, 128)
    while num_edges % et:
        et -= 128
    return et


def _vmem_bytes_estimate(n, d, h, s, f, et):
    two_et = 2 * et
    onehot = n * two_et * (4 + 2)                       # i32 iota + bf16 one-hot
    resident = (3 * (d + 1) + d) * n * 4                # init(2buf) + out + scat
    per_tile = ((d + 1) * two_et + 4 * h * et + 6 * d * et) * 4
    per_tile += 2 * (2 * s + f + 2) * et * 4            # double-buffered edge inputs
    return onehot + resident + per_tile


# --------------------------------------------------------------------------
# Wrapper: one-time glue (f32 init, static concat, weight packing) + 1 call
# --------------------------------------------------------------------------
def swe_gnn_processor(x_s, x_t, edge_index, edge_attr, params, K, edge_tile=None):
    x_s = x_s.astype(jnp.float32)
    x_t = x_t.astype(jnp.float32)
    edge_attr = edge_attr.astype(jnp.float32)
    from_node = edge_index[0].astype(jnp.int32)
    to_node = edge_index[1].astype(jnp.int32)

    n, d = x_t.shape
    e, f = edge_attr.shape
    s = x_s.shape[1]
    h = params["edge_mlp"]["W1"].shape[1]
    bf = jnp.bfloat16

    # generation-aware sizing (v7x: 64 MiB VMEM; v5e/v6e: 128 MiB)
    try:
        vmem_cap = int(pltpu.get_tpu_info().vmem_capacity_bytes)
    except Exception:
        vmem_cap = 64 << 20
    if edge_tile is None:
        edge_tile = _derive_edge_tile(e, n, vmem_cap // 4)
    assert e % edge_tile == 0, \
        "TODO(synk): pad ragged edge counts (needs explicit edge-validity mask)"
    n_tiles = e // edge_tile

    # ---- k==0 init hoisted out of the kernel (plain f32 XLA matmul)
    out0 = jnp.dot(x_t, params["filter"][0].astype(jnp.float32),
                   precision=lax.Precision.HIGHEST)                       # [N, D]
    init_t = jnp.concatenate([out0.T, jnp.zeros((1, n), jnp.float32)], 0)  # [D+1, N]

    # ---- static per-edge operand (constant across K): pre-gathered, bf16
    static_t = jnp.concatenate(
        [x_s[from_node].T, x_s[to_node].T, edge_attr.T], axis=0).astype(bf)  # [2S+F, E]
    from_row = from_node.reshape(1, e)
    to_row = to_node.reshape(1, e)

    # ---- weight packing (feature-major / transposed, bf16 MXU operands)
    w1 = params["edge_mlp"]["W1"]                                          # [2S+2D+F, H]
    w1s_t = jnp.concatenate([w1[:2 * s], w1[2 * s + 2 * d:]], 0).T.astype(bf)  # [H, 2S+F]
    w1f_t = w1[2 * s:2 * s + d].T.astype(bf)                               # [H, D]
    w1t_t = w1[2 * s + d:2 * s + 2 * d].T.astype(bf)                       # [H, D]
    b1_c = params["edge_mlp"]["b1"].reshape(h, 1).astype(jnp.float32)
    w2_t = params["edge_mlp"]["W2"].T.astype(bf)                           # [D, H]
    b2_c = params["edge_mlp"]["b2"].reshape(d, 1).astype(jnp.float32)
    alpha = params["edge_mlp"]["alpha"].reshape(1, 1).astype(jnp.float32)
    wf_t = jnp.stack([m.T for m in params["filter"][1:]]).astype(bf)       # [K, D, D]

    c00 = lambda k, ei: (0, 0)
    emap = lambda k, ei: (0, ei)
    kmap = lambda k, ei: (k, 0, 0)

    est = _vmem_bytes_estimate(n, d, h, s, f, edge_tile)
    vmem_limit = int(min(max(2 * est, 16 << 20), (3 * vmem_cap) // 4))

    grid_spec = pltpu.PrefetchScalarGridSpec(
        num_scalar_prefetch=0,
        grid=(K, n_tiles),
        in_specs=[
            pl.BlockSpec((d + 1, n), c00),                   # init [out0^T ; 0]
            pl.BlockSpec((1, edge_tile), emap),              # from indices
            pl.BlockSpec((1, edge_tile), emap),              # to indices
            pl.BlockSpec((2 * s + f, edge_tile), emap),      # static edge operand
            pl.BlockSpec((h, 2 * s + f), c00),               # W1 static part^T
            pl.BlockSpec((h, d), c00),                       # W1 out_from part^T
            pl.BlockSpec((h, d), c00),                       # W1 out_to part^T
            pl.BlockSpec((h, 1), c00),                       # b1
            pl.BlockSpec((d, h), c00),                       # W2^T
            pl.BlockSpec((d, 1), c00),                       # b2
            pl.BlockSpec((None, d, d), kmap),                # filter[k+1]^T
            pl.BlockSpec(memory_space=pltpu.MemorySpace.SMEM),  # PReLU alpha
        ],
        out_specs=pl.BlockSpec((d + 1, n), c00),
        scratch_shapes=[pltpu.VMEM((d, n), jnp.float32)],
    )

    outm = pl.pallas_call(
        swe_gnn_kernel,
        out_shape=jax.ShapeDtypeStruct((d + 1, n), jnp.float32),
        grid_spec=grid_spec,
        compiler_params=pltpu.CompilerParams(
            dimension_semantics=("arbitrary", "arbitrary"),
            vmem_limit_bytes=vmem_limit),
    )(init_t, from_row, to_row, static_t, w1s_t, w1f_t, w1t_t,
      b1_c, w2_t, b2_c, wf_t, alpha)

    return outm[:d].T                                       # [N, D]


# --------------------------------------------------------------------------
# Deterministic synthetic parameter init (shapes from __init__)
# --------------------------------------------------------------------------
def init_params(key, static_f, dyn_f, edge_f, K):
    edge_in = edge_f + 2 * static_f + 2 * dyn_f
    hidden = 2 * dyn_f
    keys = jax.random.split(key, K + 1 + 4)

    # filter_matrix: K+1 bias-free linears, all [D, D] (encoded=True)
    filt = [0.2 * jax.random.normal(keys[i], (dyn_f, dyn_f), jnp.float32)
            for i in range(K + 1)]

    kw1, kb1, kw2, kb2 = keys[K + 1:K + 5]
    edge_mlp = dict(
        W1=0.3 * jax.random.normal(kw1, (edge_in, hidden), jnp.float32),
        b1=0.1 * jax.random.normal(kb1, (1, hidden), jnp.float32),
        W2=0.3 * jax.random.normal(kw2, (hidden, dyn_f), jnp.float32),
        b2=0.1 * jax.random.normal(kb2, (1, dyn_f), jnp.float32),
        alpha=jnp.full((1, 1), 0.25, jnp.float32),           # PReLU default init
    )
    return dict(filter=filt, edge_mlp=edge_mlp)


if __name__ == "__main__":
    key = jax.random.PRNGKey(0)
    N, S, D, F, E, K = 32, 4, 8, 4, 256, 8

    k1, k2, k3, k4, k5, kp = jax.random.split(key, 6)
    x_s = jax.random.normal(k1, (N, S), jnp.float32)         # static node feats
    x_t = jax.random.normal(k2, (N, D), jnp.float32)         # dynamic node feats
    from_node = jax.random.randint(k3, (E,), 0, N)
    to_node = jax.random.randint(k4, (E,), 0, N)
    edge_index = jnp.stack([from_node, to_node], axis=0)     # [2, E]
    edge_attr = jax.random.normal(k5, (E, F), jnp.float32)   # [E, F]

    params = init_params(kp, S, D, F, K)

    fwd = jax.jit(swe_gnn_processor, static_argnums=(5, 6))
    out = fwd(x_s, x_t, edge_index, edge_attr, params, K, 128)   # 2 edge tiles
    out = jax.block_until_ready(out)

    assert out.shape == (N, D)
    assert bool(jnp.all(jnp.isfinite(out)))
    print("KERNEL_OK")
</pallas_src>

<mosaic_0001>
module attributes {stable_mosaic.version = 11 : i64} {
  func.func @swe_gnn_kernel(%arg0: i32, %arg1: i32, %arg2: memref<9x32xf32, #tpu.memory_space<vmem>>, %arg3: memref<1x128xi32, #tpu.memory_space<vmem>>, %arg4: memref<1x128xi32, #tpu.memory_space<vmem>>, %arg5: memref<12x128xbf16, #tpu.memory_space<vmem>>, %arg6: memref<16x12xbf16, #tpu.memory_space<vmem>>, %arg7: memref<16x8xbf16, #tpu.memory_space<vmem>>, %arg8: memref<16x8xbf16, #tpu.memory_space<vmem>>, %arg9: memref<16x1xf32, #tpu.memory_space<vmem>>, %arg10: memref<8x16xbf16, #tpu.memory_space<vmem>>, %arg11: memref<8x1xf32, #tpu.memory_space<vmem>>, %arg12: memref<1x8x8xbf16, #tpu.memory_space<vmem>>, %arg13: memref<1x1xf32, #tpu.memory_space<smem>>, %arg14: memref<9x32xf32, #tpu.memory_space<vmem>>, %arg15: memref<8x32xf32, #tpu.memory_space<vmem>>) attributes {dimension_semantics = [#tpu.dimension_semantics<arbitrary>, #tpu.dimension_semantics<arbitrary>], iteration_bounds = array<i64: 8, 2>, scalar_prefetch = 0 : i64, scratch_operands = 1 : i64, tpu.core_type = #tpu.core_type<tc>, window_params = [{pipeline_mode = #tpu.pipeline_mode<synchronous>, transform_indices = @transform_0, window_bounds = array<i64: 9, 32>}, {transform_indices = @transform_1, window_bounds = array<i64: 1, 128>}, {transform_indices = @transform_2, window_bounds = array<i64: 1, 128>}, {transform_indices = @transform_3, window_bounds = array<i64: 12, 128>}, {pipeline_mode = #tpu.pipeline_mode<synchronous>, transform_indices = @transform_4, window_bounds = array<i64: 16, 12>}, {pipeline_mode = #tpu.pipeline_mode<synchronous>, transform_indices = @transform_5, window_bounds = array<i64: 16, 8>}, {pipeline_mode = #tpu.pipeline_mode<synchronous>, transform_indices = @transform_6, window_bounds = array<i64: 16, 8>}, {pipeline_mode = #tpu.pipeline_mode<synchronous>, transform_indices = @transform_7, window_bounds = array<i64: 16, 1>}, {pipeline_mode = #tpu.pipeline_mode<synchronous>, transform_indices = @transform_8, window_bounds = array<i64: 8, 16>}, {pipeline_mode = #tpu.pipeline_mode<synchronous>, transform_indices = @transform_9, window_bounds = array<i64: 8, 1>}, {transform_indices = @transform_10, window_bounds = array<i64: 1, 8, 8>}, {transform_indices = @transform_11, window_bounds = array<i64: 1, 1>}, {pipeline_mode = #tpu.pipeline_mode<synchronous>, transform_indices = @transform_12, window_bounds = array<i64: 9, 32>}]} {
    %c0_i32 = arith.constant 0 : i32
    %0 = arith.cmpi eq, %arg0, %c0_i32 : i32
    %c0_i32_0 = arith.constant 0 : i32
    %1 = arith.cmpi eq, %arg1, %c0_i32_0 : i32
    %2 = arith.andi %0, %1 : i1
    %3 = arith.extui %2 : i1 to i32
    %c0_i32_1 = arith.constant 0 : i32
    %4 = arith.cmpi ne, %3, %c0_i32_1 : i32
    scf.if %4 {
      %c0_40 = arith.constant 0 : index
      %c0_41 = arith.constant 0 : index
      %75 = vector.load %arg2[%c0_40, %c0_41] : memref<9x32xf32, #tpu.memory_space<vmem>>, vector<9x32xf32>
      %c0_42 = arith.constant 0 : index
      %c0_43 = arith.constant 0 : index
      %76 = vector.load %arg14[%c0_42, %c0_43] : memref<9x32xf32, #tpu.memory_space<vmem>>, vector<9x32xf32>
      tpu.vector_store %arg14[%c0_42, %c0_43], %75 {strides = array<i32>} : memref<9x32xf32, #tpu.memory_space<vmem>>, vector<9x32xf32>,
    } else {
    }
    %c0_i32_2 = arith.constant 0 : i32
    %5 = arith.cmpi eq, %arg1, %c0_i32_2 : i32
    %6 = arith.extui %5 : i1 to i32
    %c0_i32_3 = arith.constant 0 : i32
    %7 = arith.cmpi ne, %6, %c0_i32_3 : i32
    scf.if %7 {
      %c0_40 = arith.constant 0 : index
      %c0_41 = arith.constant 0 : index
      %75 = vector.load %arg14[%c0_40, %c0_41] : memref<9x32xf32, #tpu.memory_space<vmem>>, vector<8x32xf32>
      %cst_42 = arith.constant dense<0.000000e+00> : vector<32xf32>
      %76 = vector.multi_reduction <add>, %75, %cst_42 [0] : vector<8x32xf32> to vector<32xf32>
      %77 = vector.shape_cast %76 : vector<32xf32> to vector<1x32xf32>
      %cst_43 = arith.constant 0.000000e+00 : f32
      %78 = vector.broadcast %cst_43 : f32 to vector<1x32xf32>
      %79 = arith.cmpf one, %77, %78 : vector<1x32xf32>
      %80 = arith.extui %79 : vector<1x32xi1> to vector<1x32xi32>
      %81 = arith.sitofp %80 : vector<1x32xi32> to vector<1x32xf32>
      %c8 = arith.constant 8 : index
      %c0_44 = arith.constant 0 : index
      %82 = vector.load %arg14[%c8, %c0_44] : memref<9x32xf32, #tpu.memory_space<vmem>>, vector<1x32xf32>
      tpu.vector_store %arg14[%c8, %c0_44], %81 {strides = array<i32>} : memref<9x32xf32, #tpu.memory_space<vmem>>, vector<1x32xf32>,
      %cst_45 = arith.constant 0.000000e+00 : f32
      %83 = vector.broadcast %cst_45 : f32 to vector<8x32xf32>
      %c0_46 = arith.constant 0 : index
      %c0_47 = arith.constant 0 : index
      %84 = vector.load %arg15[%c0_46, %c0_47] : memref<8x32xf32, #tpu.memory_space<vmem>>, vector<8x32xf32>
      tpu.vector_store %arg15[%c0_46, %c0_47], %83 {strides = array<i32>} : memref<8x32xf32, #tpu.memory_space<vmem>>, vector<8x32xf32>,
    } else {
    }
    %c0 = arith.constant 0 : index
    %c0_4 = arith.constant 0 : index
    %8 = vector.load %arg3[%c0, %c0_4] : memref<1x128xi32, #tpu.memory_space<vmem>>, vector<1x128xi32>
    %c0_5 = arith.constant 0 : index
    %c0_6 = arith.constant 0 : index
    %9 = vector.load %arg4[%c0_5, %c0_6] : memref<1x128xi32, #tpu.memory_space<vmem>>, vector<1x128xi32>
    %10 = tpu.concatenate %8, %9 in 1 : vector<1x128xi32>, vector<1x128xi32> -> vector<1x256xi32>
    %11 = tpu.iota {dimensions = array<i32: 0>} : vector<32x256xi32>
    %12 = vector.broadcast %10 : vector<1x256xi32> to vector<32x256xi32>
    %13 = arith.cmpi eq, %11, %12 : vector<32x256xi32>
    %14 = arith.extui %13 : vector<32x256xi1> to vector<32x256xi32>
    %15 = arith.sitofp %14 : vector<32x256xi32> to vector<32x256xf32>
    %16 = arith.truncf %15 : vector<32x256xf32> to vector<32x256xbf16>
    %c0_7 = arith.constant 0 : index
    %c0_8 = arith.constant 0 : index
    %17 = vector.load %arg14[%c0_7, %c0_8] : memref<9x32xf32, #tpu.memory_space<vmem>>, vector<9x32xf32>
    %18 = arith.truncf %17 : vector<9x32xf32> to vector<9x32xbf16>
    %cst = arith.constant dense<0.000000e+00> : vector<9x256xf32>
    %19 = tpu.matmul %18, %16, %cst {dimension_numbers = #tpu.dot_dimension_numbers<[1], [0], [0], [1], [0, 0, 1, 1], [], []>} : vector<9x32xbf16>, vector<32x256xbf16>, vector<9x256xf32> -> vector<9x256xf32>
    %20 = vector.extract_strided_slice %19 {offsets = [0, 0], sizes = [8, 128], strides = [1, 1]} : vector<9x256xf32> to vector<8x128xf32>
    %21 = vector.extract_strided_slice %19 {offsets = [0, 128], sizes = [8, 128], strides = [1, 1]} : vector<9x256xf32> to vector<8x128xf32>
    %22 = vector.extract_strided_slice %19 {offsets = [8, 0], sizes = [1, 128], strides = [1, 1]} : vector<9x256xf32> to vector<1x128xf32>
    %23 = vector.extract_strided_slice %19 {offsets = [8, 128], sizes = [1, 128], strides = [1, 1]} : vector<9x256xf32> to vector<1x128xf32>
    %c0_9 = arith.constant 0 : index
    %c0_10 = arith.constant 0 : index
    %24 = vector.load %arg6[%c0_9, %c0_10] : memref<16x12xbf16, #tpu.memory_space<vmem>>, vector<16x12xbf16>
    %c0_11 = arith.constant 0 : index
    %c0_12 = arith.constant 0 : index
    %25 = vector.load %arg5[%c0_11, %c0_12] : memref<12x128xbf16, #tpu.memory_space<vmem>>, vector<12x128xbf16>
    %cst_13 = arith.constant dense<0.000000e+00> : vector<16x128xf32>
    %26 = tpu.matmul %24, %25, %cst_13 {dimension_numbers = #tpu.dot_dimension_numbers<[1], [0], [0], [1], [0, 0, 1, 1], [], []>} : vector<16x12xbf16>, vector<12x128xbf16>, vector<16x128xf32> -> vector<16x128xf32>
    %c0_14 = arith.constant 0 : index
    %c0_15 = arith.constant 0 : index
    %27 = vector.load %arg7[%c0_14, %c0_15] : memref<16x8xbf16, #tpu.memory_space<vmem>>, vector<16x8xbf16>
    %28 = arith.truncf %20 : vector<8x128xf32> to vector<8x128xbf16>
    %cst_16 = arith.constant dense<0.000000e+00> : vector<16x128xf32>
    %29 = tpu.matmul %27, %28, %cst_16 {dimension_numbers = #tpu.dot_dimension_numbers<[1], [0], [0], [1], [0, 0, 1, 1], [], []>} : vector<16x8xbf16>, vector<8x128xbf16>, vector<16x128xf32> -> vector<16x128xf32>
    %30 = arith.addf %26, %29 : vector<16x128xf32>
    %c0_17 = arith.constant 0 : index
    %c0_18 = arith.constant 0 : index
    %31 = vector.load %arg8[%c0_17, %c0_18] : memref<16x8xbf16, #tpu.memory_space<vmem>>, vector<16x8xbf16>
    %32 = arith.truncf %21 : vector<8x128xf32> to vector<8x128xbf16>
    %cst_19 = arith.constant dense<0.000000e+00> : vector<16x128xf32>
    %33 = tpu.matmul %31, %32, %cst_19 {dimension_numbers = #tpu.dot_dimension_numbers<[1], [0], [0], [1], [0, 0, 1, 1], [], []>} : vector<16x8xbf16>, vector<8x128xbf16>, vector<16x128xf32> -> vector<16x128xf32>
    %34 = arith.addf %30, %33 : vector<16x128xf32>
    %c0_20 = arith.constant 0 : index
    %c0_21 = arith.constant 0 : index
    %35 = vector.load %arg9[%c0_20, %c0_21] : memref<16x1xf32, #tpu.memory_space<vmem>>, vector<16x1xf32>
    %36 = vector.broadcast %35 : vector<16x1xf32> to vector<16x128xf32>
    %37 = arith.addf %34, %36 : vector<16x128xf32>
    %c0_22 = arith.constant 0 : index
    %c0_23 = arith.constant 0 : index
    %38 = memref.load %arg13[%c0_22, %c0_23] : memref<1x1xf32, #tpu.memory_space<smem>>
    %cst_24 = arith.constant 0.000000e+00 : f32
    %39 = vector.broadcast %cst_24 : f32 to vector<16x128xf32>
    %40 = arith.cmpf oge, %37, %39 : vector<16x128xf32>
    %41 = vector.broadcast %38 : f32 to vector<16x128xf32>
    %42 = arith.mulf %41, %37 : vector<16x128xf32>
    %43 = arith.select %40, %37, %42 : vector<16x128xi1>, vector<16x128xf32>
    %c0_25 = arith.constant 0 : index
    %c0_26 = arith.constant 0 : index
    %44 = vector.load %arg10[%c0_25, %c0_26] : memref<8x16xbf16, #tpu.memory_space<vmem>>, vector<8x16xbf16>
    %45 = arith.truncf %43 : vector<16x128xf32> to vector<16x128xbf16>
    %cst_27 = arith.constant dense<0.000000e+00> : vector<8x128xf32>
    %46 = tpu.matmul %44, %45, %cst_27 {dimension_numbers = #tpu.dot_dimension_numbers<[1], [0], [0], [1], [0, 0, 1, 1], [], []>} : vector<8x16xbf16>, vector<16x128xbf16>, vector<8x128xf32> -> vector<8x128xf32>
    %c0_28 = arith.constant 0 : index
    %c0_29 = arith.constant 0 : index
    %47 = vector.load %arg11[%c0_28, %c0_29] : memref<8x1xf32, #tpu.memory_space<vmem>>, vector<8x1xf32>
    %48 = vector.broadcast %47 : vector<8x1xf32> to vector<8x128xf32>
    %49 = arith.addf %46, %48 : vector<8x128xf32>
    %50 = arith.mulf %49, %49 : vector<8x128xf32>
    %cst_30 = arith.constant dense<0.000000e+00> : vector<128xf32>
    %51 = vector.multi_reduction <add>, %50, %cst_30 [0] : vector<8x128xf32> to vector<128xf32>
    %52 = vector.shape_cast %51 : vector<128xf32> to vector<1x128xf32>
    %cst_31 = arith.constant 0.000000e+00 : f32
    %53 = vector.broadcast %cst_31 : f32 to vector<1x128xf32>
    %54 = arith.cmpf ogt, %52, %53 : vector<1x128xf32>
    %55 = arith.addf %22, %23 : vector<1x128xf32>
    %cst_32 = arith.constant 0.000000e+00 : f32
    %56 = vector.broadcast %cst_32 : f32 to vector<1x128xf32>
    %57 = arith.cmpf ogt, %55, %56 : vector<1x128xf32>
    %58 = arith.andi %54, %57 : vector<1x128xi1>
    %59 = math.rsqrt %52 : vector<1x128xf32>
    %cst_33 = arith.constant 0.000000e+00 : f32
    %60 = vector.broadcast %cst_33 : f32 to vector<1x128xf32>
    %61 = arith.select %58, %59, %60 : vector<1x128xi1>, vector<1x128xf32>
    %62 = arith.subf %21, %20 : vector<8x128xf32>
    %63 = arith.mulf %62, %49 : vector<8x128xf32>
    %64 = vector.broadcast %61 : vector<1x128xf32> to vector<8x128xf32>
    %65 = arith.mulf %63, %64 : vector<8x128xf32>
    %66 = vector.extract_strided_slice %16 {offsets = [0, 128], sizes = [32, 128], strides = [1, 1]} : vector<32x256xbf16> to vector<32x128xbf16>
    %c0_34 = arith.constant 0 : index
    %c0_35 = arith.constant 0 : index
    %67 = vector.load %arg15[%c0_34, %c0_35] : memref<8x32xf32, #tpu.memory_space<vmem>>, vector<8x32xf32>
    %68 = arith.truncf %65 : vector<8x128xf32> to vector<8x128xbf16>
    %cst_36 = arith.constant dense<0.000000e+00> : vector<8x32xf32>
    %69 = tpu.matmul %68, %66, %cst_36 {dimension_numbers = #tpu.dot_dimension_numbers<[1], [1], [0], [0], [0, 0, 1, 0], [], []>} : vector<8x128xbf16>, vector<32x128xbf16>, vector<8x32xf32> -> vector<8x32xf32>
    %70 = arith.addf %67, %69 : vector<8x32xf32>
    %c0_37 = arith.constant 0 : index
    %c0_38 = arith.constant 0 : index
    %71 = vector.load %arg15[%c0_37, %c0_38] : memref<8x32xf32, #tpu.memory_space<vmem>>, vector<8x32xf32>
    tpu.vector_store %arg15[%c0_37, %c0_38], %70 {strides = array<i32>} : memref<8x32xf32, #tpu.memory_space<vmem>>, vector<8x32xf32>,
    %c1_i32 = arith.constant 1 : i32
    %72 = arith.cmpi eq, %arg1, %c1_i32 : i32
    %73 = arith.extui %72 : i1 to i32
    %c0_i32_39 = arith.constant 0 : i32
    %74 = arith.cmpi ne, %73, %c0_i32_39 : i32
    scf.if %74 {
      %c0_40 = arith.constant 0 : index
      %c0_41 = arith.constant 0 : index
      %c0_42 = arith.constant 0 : index
      %75 = vector.load %arg12[%c0_40, %c0_41, %c0_42] : memref<1x8x8xbf16, #tpu.memory_space<vmem>>, vector<1x8x8xbf16>
      %76 = vector.shape_cast %75 : vector<1x8x8xbf16> to vector<8x8xbf16>
      %c0_43 = arith.constant 0 : index
      %c0_44 = arith.constant 0 : index
      %77 = vector.load %arg15[%c0_43, %c0_44] : memref<8x32xf32, #tpu.memory_space<vmem>>, vector<8x32xf32>
      %78 = arith.truncf %77 : vector<8x32xf32> to vector<8x32xbf16>
      %cst_45 = arith.constant dense<0.000000e+00> : vector<8x32xf32>
      %79 = tpu.matmul %76, %78, %cst_45 {dimension_numbers = #tpu.dot_dimension_numbers<[1], [0], [0], [1], [0, 0, 1, 1], [], []>} : vector<8x8xbf16>, vector<8x32xbf16>, vector<8x32xf32> -> vector<8x32xf32>
      %c0_46 = arith.constant 0 : index
      %c0_47 = arith.constant 0 : index
      %80 = vector.load %arg14[%c0_46, %c0_47] : memref<9x32xf32, #tpu.memory_space<vmem>>, vector<8x32xf32>
      %81 = arith.addf %80, %79 : vector<8x32xf32>
      %c0_48 = arith.constant 0 : index
      %c0_49 = arith.constant 0 : index
      %82 = vector.load %arg14[%c0_48, %c0_49] : memref<9x32xf32, #tpu.memory_space<vmem>>, vector<8x32xf32>
      tpu.vector_store %arg14[%c0_48, %c0_49], %81 {strides = array<i32>} : memref<9x32xf32, #tpu.memory_space<vmem>>, vector<8x32xf32>,
    } else {
    }
    return
  }
  func.func @transform_0(%arg0: i32, %arg1: i32) -> (i32, i32) {
    %c0_i32 = arith.constant 0 : i32
    %c0_i32_0 = arith.constant 0 : i32
    %c0_i32_1 = arith.constant 0 : i32
    return %c0_i32, %c0_i32_0 : i32, i32
  }
  func.func @transform_1(%arg0: i32, %arg1: i32) -> (i32, i32) {
    %c0_i32 = arith.constant 0 : i32
    %c0_i32_0 = arith.constant 0 : i32
    return %c0_i32, %arg1 : i32, i32
  }
  func.func @transform_2(%arg0: i32, %arg1: i32) -> (i32, i32) {
    %c0_i32 = arith.constant 0 : i32
    %c0_i32_0 = arith.constant 0 : i32
    return %c0_i32, %arg1 : i32, i32
  }
  func.func @transform_3(%arg0: i32, %arg1: i32) -> (i32, i32) {
    %c0_i32 = arith.constant 0 : i32
    %c0_i32_0 = arith.constant 0 : i32
    return %c0_i32, %arg1 : i32, i32
  }
  func.func @transform_4(%arg0: i32, %arg1: i32) -> (i32, i32) {
    %c0_i32 = arith.constant 0 : i32
    %c0_i32_0 = arith.constant 0 : i32
    %c0_i32_1 = arith.constant 0 : i32
    return %c0_i32, %c0_i32_0 : i32, i32
  }
  func.func @transform_5(%arg0: i32, %arg1: i32) -> (i32, i32) {
    %c0_i32 = arith.constant 0 : i32
    %c0_i32_0 = arith.constant 0 : i32
    %c0_i32_1 = arith.constant 0 : i32
    return %c0_i32, %c0_i32_0 : i32, i32
  }
  func.func @transform_6(%arg0: i32, %arg1: i32) -> (i32, i32) {
    %c0_i32 = arith.constant 0 : i32
    %c0_i32_0 = arith.constant 0 : i32
    %c0_i32_1 = arith.constant 0 : i32
    return %c0_i32, %c0_i32_0 : i32, i32
  }
  func.func @transform_7(%arg0: i32, %arg1: i32) -> (i32, i32) {
    %c0_i32 = arith.constant 0 : i32
    %c0_i32_0 = arith.constant 0 : i32
    %c0_i32_1 = arith.constant 0 : i32
    return %c0_i32, %c0_i32_0 : i32, i32
  }
  func.func @transform_8(%arg0: i32, %arg1: i32) -> (i32, i32) {
    %c0_i32 = arith.constant 0 : i32
    %c0_i32_0 = arith.constant 0 : i32
    %c0_i32_1 = arith.constant 0 : i32
    return %c0_i32, %c0_i32_0 : i32, i32
  }
  func.func @transform_9(%arg0: i32, %arg1: i32) -> (i32, i32) {
    %c0_i32 = arith.constant 0 : i32
    %c0_i32_0 = arith.constant 0 : i32
    %c0_i32_1 = arith.constant 0 : i32
    return %c0_i32, %c0_i32_0 : i32, i32
  }
  func.func @transform_10(%arg0: i32, %arg1: i32) -> (i32, i32, i32) {
    %c0_i32 = arith.constant 0 : i32
    %c0_i32_0 = arith.constant 0 : i32
    %c0_i32_1 = arith.constant 0 : i32
    return %arg0, %c0_i32, %c0_i32_0 : i32, i32, i32
  }
  func.func @transform_11(%arg0: i32, %arg1: i32) -> (i32, i32) {
    %c0_i32 = arith.constant 0 : i32
    %c0_i32_0 = arith.constant 0 : i32
    %c0_i32_1 = arith.constant 0 : i32
    return %c0_i32, %c0_i32_0 : i32, i32
  }
  func.func @transform_12(%arg0: i32, %arg1: i32) -> (i32, i32) {
    %c0_i32 = arith.constant 0 : i32
    %c0_i32_0 = arith.constant 0 : i32
    %c0_i32_1 = arith.constant 0 : i32
    return %c0_i32, %c0_i32_0 : i32, i32
  }
}

</mosaic_0001>

<llo_original>
// kernel: swe_gnn_processor.1
$region0: #{swe_gnn_processor.1}
  #allocation0 [shape = 'u32[]', space=smem, size = 0x4, offset = 0x4, fixed_abs, tag = 'smem constant byte address 0x4 - core index']
  #allocation1 [shape = 'u32[144,128]{1,0:T(1,128)}', space=vmem, size = 0x12000, scoped, tag = 'internal scratch']
  #allocation2 [shape = 'f32[8,32]{1,0:T(8,128)}', space=vmem, size = 0x1000, scoped, tag = 'scratch operand']
  #allocation3 [shape = 'f32[1,1]{1,0:T(1,128)S(6)}', space=smem, size = 0x200, scoped, tag = 'scoped memory for swe_gnn_processor.1']
  %s0 = inlined_call_operand.vmem [shape: f32[9,32], index: 0, kind: input, shape index: {}]
  %s1 = inlined_call_operand.vmem [shape: s32[1,256], index: 1, kind: input, shape index: {}]
  %s2 = inlined_call_operand.vmem [shape: s32[1,256], index: 2, kind: input, shape index: {}]
  %s3 = inlined_call_operand.vmem [shape: bf16[12,256], index: 3, kind: input, shape index: {}]
  %s4 = inlined_call_operand.vmem [shape: bf16[16,12], index: 4, kind: input, shape index: {}]
  %s5 = inlined_call_operand.vmem [shape: bf16[16,8], index: 5, kind: input, shape index: {}]
  %s6 = inlined_call_operand.vmem [shape: bf16[16,8], index: 6, kind: input, shape index: {}]
  %s7 = inlined_call_operand.vmem [shape: f32[16,1], index: 7, kind: input, shape index: {}]
  %s8 = inlined_call_operand.vmem [shape: bf16[8,16], index: 8, kind: input, shape index: {}]
  %s9 = inlined_call_operand.vmem [shape: f32[8,1], index: 9, kind: input, shape index: {}]
  %s10 = inlined_call_operand.vmem [shape: bf16[8,8,8], index: 10, kind: input, shape index: {}]
  %s11 = inlined_call_operand.<no memory space> [shape: f32[1,1], index: 11, kind: input, shape index: {}]
  %s12 = inlined_call_operand.vmem [shape: f32[9,32], index: 12, kind: output, shape index: {}]
  %s13 = sld [smem:[#allocation0]]
  $region134: #{swe_gnn_processor.1} parent=0
    _
  %s15 = ssub.s32 1, %s13
  %s16 = scalar_select 0, %s15, %s13
  %17 = sst [smem:[#allocation3]] %s11
  $region1: #{swe_gnn_processor.1} parent=0
    #allocation4 [shape = 'u8[8192]{0}', space=vmem, size = 0x2000, scoped, tag = 'input window, operand 3']
    loop: start=0, step=1, limit=18
    $region2: #{swe_gnn_processor.1} parent=1 // loop_pre_header
      _
    $region3: #{swe_gnn_processor.1} parent=1 // loop_header
      %s19 = sphi 0, %s23
      %p20 = scmp.ge.s32.totalorder %s19, 18
      %s26 = sphi 0, %s38
      %s27 = sphi 0, %s34
      %s28 = sphi 0, %s26
      %s29 = sphi 0, %s27
      %s30 = sphi 0, %s28
      %s31 = sphi 0, %s29
      %s39 = sphi 0, %s39
      %s41 = sphi 0, %s39
      %s42 = sphi 0, %s41
      %s56 = sphi 0, %s42
      %s62 = sphi 0, %s64
      %s65 = sphi 0, %s62
      %s66 = sphi 0, %s65
      %s82 = sphi 0, %s66
      %s88 = sphi 0, %s90
      %s91 = sphi 0, %s88
      %s92 = sphi 0, %s91
      %s108 = sphi 0, %s92
      %s114 = sphi 0, %s116
      %s117 = sphi 0, %s114
      %s118 = sphi 0, %s117
      %s134 = sphi 0, %s118
      %s138 = sphi 0, %s138
      %s140 = sphi 0, %s138
      %s141 = sphi 0, %s140
      %s155 = sphi 0, %s141
      %s159 = sphi 0, %s159
      %s161 = sphi 0, %s159
      %s162 = sphi 0, %s161
      %s176 = sphi 0, %s162
      %s180 = sphi 0, %s180
      %s182 = sphi 0, %s180
      %s183 = sphi 0, %s182
      %s197 = sphi 0, %s183
      %s201 = sphi 0, %s201
      %s203 = sphi 0, %s201
      %s204 = sphi 0, %s203
      %s218 = sphi 0, %s204
      %s222 = sphi 0, %s222
      %s224 = sphi 0, %s222
      %s225 = sphi 0, %s224
      %s239 = sphi 0, %s225
      %s243 = sphi 0, %s243
      %s245 = sphi 0, %s243
      %s246 = sphi 0, %s245
      %s260 = sphi 0, %s246
      %s266 = sphi 0, %s268
      %s269 = sphi 0, %s266
      %s270 = sphi 0, %s269
      %s286 = sphi 0, %s270
      %s290 = sphi 0, %s290
      %s292 = sphi 0, %s290
      %s293 = sphi 0, %s292
      %s307 = sphi 0, %s293
      %s311 = sphi 0, %s311
      %s313 = sphi 0, %s311
      %s314 = sphi 0, %s313
      %s328 = sphi 0, %s314
    $region4: #{swe_gnn_processor.1} parent=1 // loop_header_branch
      %22 = sbr.rel (%p20) target = $region8
    $region5: #{swe_gnn_processor.1} parent=1 // loop_body
      %s24 = ssub.s32 %s19, 1
      %s25 = ssub.s32 %s19, 2
      %s32 = sadd.s32 1, %s27
      %p33 = scmp.ge.s32.totalorder %s32, 2
      %s34 = scalar_select %p33, 0, %s32
      %s35 = sadd.s32 1, %s26
      %s36 = scalar_select %p33, %s35, %s26
      %p37 = scmp.ge.s32.totalorder %s36, 8
      %s38 = scalar_select %p37, 0, %s36
      %s40 = sadd.s32 %s39, 1
      %p43 = scmp.eq.s32.totalorder %s19, 15
      %p44 = scmp.ne.s32.totalorder %s39, %s41
      %p45 = scmp.eq.s32.totalorder %s19, 0
      %p46 = por %p44, %p45
      %p47 = scmp.ne.s32.totalorder %s39, %s41
      %p48 = scmp.eq.s32.totalorder %s24, 15
      %p49 = por %p47, %p48
      %p50 = scmp.ne.s32.totalorder %s41, %s42
      %p51 = scmp.eq.s32.totalorder %s24, 0
      %p52 = por %p50, %p51
      %p53 = scmp.ne.s32.totalorder %s41, %s42
      %p54 = scmp.eq.s32.totalorder %s25, 15
      %p55 = por %p53, %p54
      %p57 = scmp.ne.s32.totalorder %s42, %s56
      %p58 = scmp.eq.s32.totalorder %s25, 0
      %p59 = por %p57, %p58
      %s60 = ssub.s32 %s27, %s34
      %p61 = scmp.eq.s32.totalorder %s60, 0
      %s63 = sadd.s32 %s62, 1
      %s64 = scalar_select %p61, %s62, %s63
      %p67 = pneg %p61
      %p68 = scmp.eq.s32.totalorder %s19, 15
      %p69 = por %p67, %p68
      %p70 = scmp.ne.s32.totalorder %s62, %s65
      %p71 = scmp.eq.s32.totalorder %s19, 0
      %p72 = por %p70, %p71
      %p73 = scmp.ne.s32.totalorder %s62, %s65
      %p74 = scmp.eq.s32.totalorder %s24, 15
      %p75 = por %p73, %p74
      %p76 = scmp.ne.s32.totalorder %s65, %s66
      %p77 = scmp.eq.s32.totalorder %s24, 0
      %p78 = por %p76, %p77
      %p79 = scmp.ne.s32.totalorder %s65, %s66
      %p80 = scmp.eq.s32.totalorder %s25, 15
      %p81 = por %p79, %p80
      %p83 = scmp.ne.s32.totalorder %s66, %s82
      %p84 = scmp.eq.s32.totalorder %s25, 0
      %p85 = por %p83, %p84
      %s86 = ssub.s32 %s27, %s34
      %p87 = scmp.eq.s32.totalorder %s86, 0
      %s89 = sadd.s32 %s88, 1
      %s90 = scalar_select %p87, %s88, %s89
      %p93 = pneg %p87
      %p94 = scmp.eq.s32.totalorder %s19, 15
      %p95 = por %p93, %p94
      %p96 = scmp.ne.s32.totalorder %s88, %s91
      %p97 = scmp.eq.s32.totalorder %s19, 0
      %p98 = por %p96, %p97
      %p99 = scmp.ne.s32.totalorder %s88, %s91
      %p100 = scmp.eq.s32.totalorder %s24, 15
      %p101 = por %p99, %p100
      %p102 = scmp.ne.s32.totalorder %s91, %s92
      %p103 = scmp.eq.s32.totalorder %s24, 0
      %p104 = por %p102, %p103
      %p105 = scmp.ne.s32.totalorder %s91, %s92
      %p106 = scmp.eq.s32.totalorder %s25, 15
      %p107 = por %p105, %p106
      %p109 = scmp.ne.s32.totalorder %s92, %s108
      %p110 = scmp.eq.s32.totalorder %s25, 0
      %p111 = por %p109, %p110
      %s112 = ssub.s32 %s27, %s34
      %p113 = scmp.eq.s32.totalorder %s112, 0
      %s115 = sadd.s32 %s114, 1
      %s116 = scalar_select %p113, %s114, %s115
      %p119 = pneg %p113
      %p120 = scmp.eq.s32.totalorder %s19, 15
      %p121 = por %p119, %p120
      %p122 = scmp.ne.s32.totalorder %s114, %s117
      %p123 = scmp.eq.s32.totalorder %s19, 0
      %p124 = por %p122, %p123
      %p125 = scmp.ne.s32.totalorder %s114, %s117
      %p126 = scmp.eq.s32.totalorder %s24, 15
      %p127 = por %p125, %p126
      %p128 = scmp.ne.s32.totalorder %s117, %s118
      %p129 = scmp.eq.s32.totalorder %s24, 0
      %p130 = por %p128, %p129
      %p131 = scmp.ne.s32.totalorder %s117, %s118
      %p132 = scmp.eq.s32.totalorder %s25, 15
      %p133 = por %p131, %p132
      %p135 = scmp.ne.s32.totalorder %s118, %s134
      %p136 = scmp.eq.s32.totalorder %s25, 0
      %p137 = por %p135, %p136
      %s139 = sadd.s32 %s138, 1
      %p142 = scmp.eq.s32.totalorder %s19, 15
      %p143 = scmp.ne.s32.totalorder %s138, %s140
      %p144 = scmp.eq.s32.totalorder %s19, 0
      %p145 = por %p143, %p144
      %p146 = scmp.ne.s32.totalorder %s138, %s140
      %p147 = scmp.eq.s32.totalorder %s24, 15
      %p148 = por %p146, %p147
      %p149 = scmp.ne.s32.totalorder %s140, %s141
      %p150 = scmp.eq.s32.totalorder %s24, 0
      %p151 = por %p149, %p150
      %p152 = scmp.ne.s32.totalorder %s140, %s141
      %p153 = scmp.eq.s32.totalorder %s25, 15
      %p154 = por %p152, %p153
      %p156 = scmp.ne.s32.totalorder %s141, %s155
      %p157 = scmp.eq.s32.totalorder %s25, 0
      %p158 = por %p156, %p157
      %s160 = sadd.s32 %s159, 1
      %p163 = scmp.eq.s32.totalorder %s19, 15
      %p164 = scmp.ne.s32.totalorder %s159, %s161
      %p165 = scmp.eq.s32.totalorder %s19, 0
      %p166 = por %p164, %p165
      %p167 = scmp.ne.s32.totalorder %s159, %s161
      %p168 = scmp.eq.s32.totalorder %s24, 15
      %p169 = por %p167, %p168
      %p170 = scmp.ne.s32.totalorder %s161, %s162
      %p171 = scmp.eq.s32.totalorder %s24, 0
      %p172 = por %p170, %p171
      %p173 = scmp.ne.s32.totalorder %s161, %s162
      %p174 = scmp.eq.s32.totalorder %s25, 15
      %p175 = por %p173, %p174
      %p177 = scmp.ne.s32.totalorder %s162, %s176
      %p178 = scmp.eq.s32.totalorder %s25, 0
      %p179 = por %p177, %p178
      %s181 = sadd.s32 %s180, 1
      %p184 = scmp.eq.s32.totalorder %s19, 15
      %p185 = scmp.ne.s32.totalorder %s180, %s182
      %p186 = scmp.eq.s32.totalorder %s19, 0
      %p187 = por %p185, %p186
      %p188 = scmp.ne.s32.totalorder %s180, %s182
      %p189 = scmp.eq.s32.totalorder %s24, 15
      %p190 = por %p188, %p189
      %p191 = scmp.ne.s32.totalorder %s182, %s183
      %p192 = scmp.eq.s32.totalorder %s24, 0
      %p193 = por %p191, %p192
      %p194 = scmp.ne.s32.totalorder %s182, %s183
      %p195 = scmp.eq.s32.totalorder %s25, 15
      %p196 = por %p194, %p195
      %p198 = scmp.ne.s32.totalorder %s183, %s197
      %p199 = scmp.eq.s32.totalorder %s25, 0
      %p200 = por %p198, %p199
      %s202 = sadd.s32 %s201, 1
      %p205 = scmp.eq.s32.totalorder %s19, 15
      %p206 = scmp.ne.s32.totalorder %s201, %s203
      %p207 = scmp.eq.s32.totalorder %s19, 0
      %p208 = por %p206, %p207
      %p209 = scmp.ne.s32.totalorder %s201, %s203
      %p210 = scmp.eq.s32.totalorder %s24, 15
      %p211 = por %p209, %p210
      %p212 = scmp.ne.s32.totalorder %s203, %s204
      %p213 = scmp.eq.s32.totalorder %s24, 0
      %p214 = por %p212, %p213
      %p215 = scmp.ne.s32.totalorder %s203, %s204
      %p216 = scmp.eq.s32.totalorder %s25, 15
      %p217 = por %p215, %p216
      %p219 = scmp.ne.s32.totalorder %s204, %s218
      %p220 = scmp.eq.s32.totalorder %s25, 0
      %p221 = por %p219, %p220
      %s223 = sadd.s32 %s222, 1
      %p226 = scmp.eq.s32.totalorder %s19, 15
      %p227 = scmp.ne.s32.totalorder %s222, %s224
      %p228 = scmp.eq.s32.totalorder %s19, 0
      %p229 = por %p227, %p228
      %p230 = scmp.ne.s32.totalorder %s222, %s224
      %p231 = scmp.eq.s32.totalorder %s24, 15
      %p232 = por %p230, %p231
      %p233 = scmp.ne.s32.totalorder %s224, %s225
      %p234 = scmp.eq.s32.totalorder %s24, 0
      %p235 = por %p233, %p234
      %p236 = scmp.ne.s32.totalorder %s224, %s225
      %p237 = scmp.eq.s32.totalorder %s25, 15
      %p238 = por %p236, %p237
      %p240 = scmp.ne.s32.totalorder %s225, %s239
      %p241 = scmp.eq.s32.totalorder %s25, 0
      %p242 = por %p240, %p241
      %s244 = sadd.s32 %s243, 1
      %p247 = scmp.eq.s32.totalorder %s19, 15
      %p248 = scmp.ne.s32.totalorder %s243, %s245
      %p249 = scmp.eq.s32.totalorder %s19, 0
      %p250 = por %p248, %p249
      %p251 = scmp.ne.s32.totalorder %s243, %s245
      %p252 = scmp.eq.s32.totalorder %s24, 15
      %p253 = por %p251, %p252
      %p254 = scmp.ne.s32.totalorder %s245, %s246
      %p255 = scmp.eq.s32.totalorder %s24, 0
      %p256 = por %p254, %p255
      %p257 = scmp.ne.s32.totalorder %s245, %s246
      %p258 = scmp.eq.s32.totalorder %s25, 15
      %p259 = por %p257, %p258
      %p261 = scmp.ne.s32.totalorder %s246, %s260
      %p262 = scmp.eq.s32.totalorder %s25, 0
      %p263 = por %p261, %p262
      %s264 = ssub.s32 %s26, %s38
      %p265 = scmp.eq.s32.totalorder %s264, 0
      %s267 = sadd.s32 %s266, 1
      %s268 = scalar_select %p265, %s266, %s267
      %p271 = pneg %p265
      %p272 = scmp.eq.s32.totalorder %s19, 15
      %p273 = por %p271, %p272
      %p274 = scmp.ne.s32.totalorder %s266, %s269
      %p275 = scmp.eq.s32.totalorder %s19, 0
      %p276 = por %p274, %p275
      %p277 = scmp.ne.s32.totalorder %s266, %s269
      %p278 = scmp.eq.s32.totalorder %s24, 15
      %p279 = por %p277, %p278
      %p280 = scmp.ne.s32.totalorder %s269, %s270
      %p281 = scmp.eq.s32.totalorder %s24, 0
      %p282 = por %p280, %p281
      %p283 = scmp.ne.s32.totalorder %s269, %s270
      %p284 = scmp.eq.s32.totalorder %s25, 15
      %p285 = por %p283, %p284
      %p287 = scmp.ne.s32.totalorder %s270, %s286
      %p288 = scmp.eq.s32.totalorder %s25, 0
      %p289 = por %p287, %p288
      %s291 = sadd.s32 %s290, 1
      %p294 = scmp.eq.s32.totalorder %s19, 15
      %p295 = scmp.ne.s32.totalorder %s290, %s292
      %p296 = scmp.eq.s32.totalorder %s19, 0
      %p297 = por %p295, %p296
      %p298 = scmp.ne.s32.totalorder %s290, %s292
      %p299 = scmp.eq.s32.totalorder %s24, 15
      %p300 = por %p298, %p299
      %p301 = scmp.ne.s32.totalorder %s292, %s293
      %p302 = scmp.eq.s32.totalorder %s24, 0
      %p303 = por %p301, %p302
      %p304 = scmp.ne.s32.totalorder %s292, %s293
      %p305 = scmp.eq.s32.totalorder %s25, 15
      %p306 = por %p304, %p305
      %p308 = scmp.ne.s32.totalorder %s293, %s307
      %p309 = scmp.eq.s32.totalorder %s25, 0
      %p310 = por %p308, %p309
      %s312 = sadd.s32 %s311, 1
      %p315 = scmp.eq.s32.totalorder %s19, 15
      %p316 = scmp.ne.s32.totalorder %s311, %s313
      %p317 = scmp.eq.s32.totalorder %s19, 0
      %p318 = por %p316, %p317
      %p319 = scmp.ne.s32.totalorder %s311, %s313
      %p320 = scmp.eq.s32.totalorder %s24, 15
      %p321 = por %p319, %p320
      %p322 = scmp.ne.s32.totalorder %s313, %s314
      %p323 = scmp.eq.s32.totalorder %s24, 0
      %p324 = por %p322, %p323
      %p325 = scmp.ne.s32.totalorder %s313, %s314
      %p326 = scmp.eq.s32.totalorder %s25, 15
      %p327 = por %p325, %p326
      %p329 = scmp.ne.s32.totalorder %s314, %s328
      %p330 = scmp.eq.s32.totalorder %s25, 0
      %p331 = por %p329, %p330
      %p332 = scmp.le.s32.totalorder 1, %s19
      %p333 = scmp.lt.s32.totalorder %s19, 17
      %p334 = pnand %p332, %p333
      %p335 = pneg %p334
      // Predicated region
      $region9: #{swe_gnn_processor.1} parent=5 // pred_check
        _
      $region10: #{swe_gnn_processor.1} parent=5 // pred_check_branch
        %337 = sbr.rel (%p334) target = $region12
      $region11: #{swe_gnn_processor.1} parent=5 // pred_region
        %s338 = ssub.s32 %s19, 1
        // Predicated region
        $region13: #{swe_gnn_processor.1} parent=11 // pred_check
          %p339 = pneg %p52
        $region14: #{swe_gnn_processor.1} parent=11 // pred_check_branch
          %341 = sbr.rel (%p339) target = $region16
        $region15: #{swe_gnn_processor.1} parent=11 // pred_region
          _
        $region16: #{swe_gnn_processor.1} parent=11 // pred_fallthru
          _
        // Predicated region
        $region17: #{swe_gnn_processor.1} parent=11 // pred_check
          %p342 = pneg %p151
        $region18: #{swe_gnn_processor.1} parent=11 // pred_check_branch
          %344 = sbr.rel (%p342) target = $region20
        $region19: #{swe_gnn_processor.1} parent=11 // pred_region
          _
        $region20: #{swe_gnn_processor.1} parent=11 // pred_fallthru
          _
        // Predicated region
        $region21: #{swe_gnn_processor.1} parent=11 // pred_check
          %p345 = pneg %p172
        $region22: #{swe_gnn_processor.1} parent=11 // pred_check_branch
          %347 = sbr.rel (%p345) target = $region24
        $region23: #{swe_gnn_processor.1} parent=11 // pred_region
          _
        $region24: #{swe_gnn_processor.1} parent=11 // pred_fallthru
          _
        // Predicated region
        $region25: #{swe_gnn_processor.1} parent=11 // pred_check
          %p348 = pneg %p193
        $region26: #{swe_gnn_processor.1} parent=11 // pred_check_branch
          %350 = sbr.rel (%p348) target = $region28
        $region27: #{swe_gnn_processor.1} parent=11 // pred_region
          _
        $region28: #{swe_gnn_processor.1} parent=11 // pred_fallthru
          _
        // Predicated region
        $region29: #{swe_gnn_processor.1} parent=11 // pred_check
          %p351 = pneg %p214
        $region30: #{swe_gnn_processor.1} parent=11 // pred_check_branch
          %353 = sbr.rel (%p351) target = $region32
        $region31: #{swe_gnn_processor.1} parent=11 // pred_region
          _
        $region32: #{swe_gnn_processor.1} parent=11 // pred_fallthru
          _
        // Predicated region
        $region33: #{swe_gnn_processor.1} parent=11 // pred_check
          %p354 = pneg %p235
        $region34: #{swe_gnn_processor.1} parent=11 // pred_check_branch
          %356 = sbr.rel (%p354) target = $region36
        $region35: #{swe_gnn_processor.1} parent=11 // pred_region
          _
        $region36: #{swe_gnn_processor.1} parent=11 // pred_fallthru
          _
        // Predicated region
        $region37: #{swe_gnn_processor.1} parent=11 // pred_check
          %p357 = pneg %p256
        $region38: #{swe_gnn_processor.1} parent=11 // pred_check_branch
          %359 = sbr.rel (%p357) target = $region40
        $region39: #{swe_gnn_processor.1} parent=11 // pred_region
          _
        $region40: #{swe_gnn_processor.1} parent=11 // pred_fallthru
          _
        // Predicated region
        $region41: #{swe_gnn_processor.1} parent=11 // pred_check
          %p360 = pneg %p303
        $region42: #{swe_gnn_processor.1} parent=11 // pred_check_branch
          %362 = sbr.rel (%p360) target = $region44
        $region43: #{swe_gnn_processor.1} parent=11 // pred_region
          _
        $region44: #{swe_gnn_processor.1} parent=11 // pred_fallthru
          _
      $region12: #{swe_gnn_processor.1} parent=5 // pred_fallthru
        _
      %p363 = scmp.lt.s32.totalorder %s19, 16
      // Predicated region
      $region45: #{swe_gnn_processor.1} parent=5 // pred_check
        %p364 = pneg %p363
      $region46: #{swe_gnn_processor.1} parent=5 // pred_check_branch
        %366 = sbr.rel (%p364) target = $region48
      $region47: #{swe_gnn_processor.1} parent=5 // pred_region
        // Predicated region
        $region49: #{swe_gnn_processor.1} parent=47 // pred_check
          %p367 = pneg %p72
        $region50: #{swe_gnn_processor.1} parent=47 // pred_check_branch
          %369 = sbr.rel (%p367) target = $region52
        $region51: #{swe_gnn_processor.1} parent=47 // pred_region
          %p370 = scmp.lt.s32.totalorder %s27, 1
          %s371 = scalar_select %p370, %s27, 1
          %s372 = scalar_lea.vmem %s1, %s371
        $region52: #{swe_gnn_processor.1} parent=47 // pred_fallthru
          _
        // Predicated region
        $region53: #{swe_gnn_processor.1} parent=47 // pred_check
          %p373 = pneg %p98
        $region54: #{swe_gnn_processor.1} parent=47 // pred_check_branch
          %375 = sbr.rel (%p373) target = $region56
        $region55: #{swe_gnn_processor.1} parent=47 // pred_region
          %p376 = scmp.lt.s32.totalorder %s27, 1
          %s377 = scalar_select %p376, %s27, 1
          %s378 = scalar_lea.vmem %s2, %s377
        $region56: #{swe_gnn_processor.1} parent=47 // pred_fallthru
          _
        // Predicated region
        $region57: #{swe_gnn_processor.1} parent=47 // pred_check
          %p379 = pneg %p124
        $region58: #{swe_gnn_processor.1} parent=47 // pred_check_branch
          %381 = sbr.rel (%p379) target = $region60
        $region59: #{swe_gnn_processor.1} parent=47 // pred_region
          %s382 = sand.u32 %s114, 1
          %s383 = sand.u32 %s114, 1
          %s384 = smul.addr %s383, 8
          %s385 = scalar_lea.vmem [#allocation4], %s384
          %s386 = smul.addr %s27, 4
          %s387 = scalar_lea.vmem %s3, %s386
          // Predicated region
          $region61: #{swe_gnn_processor.1} parent=59 // pred_check
            _
          $region62: #{swe_gnn_processor.1} parent=59 // pred_check_branch
            %389 = sbr.rel (0) target = $region64
          $region63: #{swe_gnn_processor.1} parent=59 // pred_region
            // Predicated region
            $region65: #{swe_gnn_processor.1} parent=63 // pred_check
              _
            $region66: #{swe_gnn_processor.1} parent=63 // pred_check_branch
              %391 = sbr.rel target = $region68
            $region67: #{swe_gnn_processor.1} parent=63 // pred_region
              // Predicated region
              $region80: #{swe_gnn_processor.1} parent=67 // pred_check
                _
              $region81: #{swe_gnn_processor.1} parent=67 // pred_check_branch
                %409 = sbr.rel (0) target = $region83
              $region82: #{swe_gnn_processor.1} parent=67 // pred_region
                loop: start=0, step=1, limit=1
                $region84: #{swe_gnn_processor.1} parent=82 // loop_pre_header
                  _
                $region85: #{swe_gnn_processor.1} parent=82 // loop_header
                  %s411 = sphi 0, %s415
                  %p412 = scmp.ge.s32.totalorder %s411, 1
                  %s416 = sphi %s387, %s387
                  %s417 = sphi %s385, %s385
                $region86: #{swe_gnn_processor.1} parent=82 // loop_header_branch
                  %414 = sbr.rel (%p412) target = $region90
                $region87: #{swe_gnn_processor.1} parent=82 // loop_body
                  _
                $region88: #{swe_gnn_processor.1} parent=82 // loop_footer
                  %s415 = sadd.s32 1, %s411
                $region89: #{swe_gnn_processor.1} parent=82 // loop_footer_branch
                  %410 = sbr.rel target = $region85
                $region90: #{swe_gnn_processor.1} parent=82 // loop_exit
                  _
                %s419 = ssub.s32 16, 1
                loop: start=0, step=1, limit=1
                $region91: #{swe_gnn_processor.1} parent=82 // loop_pre_header
                  _
                $region92: #{swe_gnn_processor.1} parent=82 // loop_header
                  %s421 = sphi 0, %s425
                  %p422 = scmp.ge.s32.totalorder %s421, 1
                  %s426 = sphi %s387, %s387
                  %s427 = sphi %s385, %s385
                $region93: #{swe_gnn_processor.1} parent=82 // loop_header_branch
                  %424 = sbr.rel (%p422) target = $region97
                $region94: #{swe_gnn_processor.1} parent=82 // loop_body
                  %v428 = vld [vmem:[%s426] sm:%s419]
                  %429 = vst [vmem:[%s427] sm:%s419] %v428
                  %v430 = vld [vmem:[%s426 + $0x8] sm:%s419]
                  %431 = vst [vmem:[%s427 + $0x4] sm:%s419] %v430
                $region95: #{swe_gnn_processor.1} parent=82 // loop_footer
                  %s425 = sadd.s32 1, %s421
                $region96: #{swe_gnn_processor.1} parent=82 // loop_footer_branch
                  %420 = sbr.rel target = $region92
                $region97: #{swe_gnn_processor.1} parent=82 // loop_exit
                  _
              $region83: #{swe_gnn_processor.1} parent=67 // pred_fallthru
                _
            $region68: #{swe_gnn_processor.1} parent=63 // pred_fallthru
              _
            // Predicated region
            $region69: #{swe_gnn_processor.1} parent=63 // pred_check
              _
            $region70: #{swe_gnn_processor.1} parent=63 // pred_check_branch
              %393 = sbr.rel (0) target = $region72
            $region71: #{swe_gnn_processor.1} parent=63 // pred_region
              %s395 = ssub.s32 16, 1
              loop: start=0, step=1, limit=1
              $region73: #{swe_gnn_processor.1} parent=71 // loop_pre_header
                _
              $region74: #{swe_gnn_processor.1} parent=71 // loop_header
                %s397 = sphi 0, %s401
                %p398 = scmp.ge.s32.totalorder %s397, 1
                %s402 = sphi %s387, %s387
                %s403 = sphi %s385, %s385
              $region75: #{swe_gnn_processor.1} parent=71 // loop_header_branch
                %400 = sbr.rel (%p398) target = $region79
              $region76: #{swe_gnn_processor.1} parent=71 // loop_body
                %v404 = vld [vmem:[%s402] sm:%s395]
                %405 = vst [vmem:[%s403] sm:%s395] %v404
                %v406 = vld [vmem:[%s402 + $0x8] sm:%s395]
                %407 = vst [vmem:[%s403 + $0x4] sm:%s395] %v406
              $region77: #{swe_gnn_processor.1} parent=71 // loop_footer
                %s401 = sadd.s32 1, %s397
              $region78: #{swe_gnn_processor.1} parent=71 // loop_footer_branch
                %396 = sbr.rel target = $region74
              $region79: #{swe_gnn_processor.1} parent=71 // loop_exit
                _
            $region72: #{swe_gnn_processor.1} parent=63 // pred_fallthru
              _
          $region64: #{swe_gnn_processor.1} parent=59 // pred_fallthru
            _
          %432 = vnop
        $region60: #{swe_gnn_processor.1} parent=47 // pred_fallthru
          _
        // Predicated region
        $region98: #{swe_gnn_processor.1} parent=47 // pred_check
          %p433 = pneg %p276
        $region99: #{swe_gnn_processor.1} parent=47 // pred_check_branch
          %435 = sbr.rel (%p433) target = $region101
        $region100: #{swe_gnn_processor.1} parent=47 // pred_region
          %p436 = scmp.lt.s32.totalorder %s26, 7
          %s437 = scalar_select %p436, %s26, 7
          %s438 = smul.addr %s437, 4
          %s439 = scalar_lea.vmem %s10, %s438
        $region101: #{swe_gnn_processor.1} parent=47 // pred_fallthru
          _
      $region48: #{swe_gnn_processor.1} parent=5 // pred_fallthru
        _
      %p440 = scmp.le.s32.totalorder 1, %s19
      %p441 = scmp.lt.s32.totalorder %s19, 17
      %p442 = pnand %p440, %p441
      %p443 = pneg %p442
      // Predicated region
      $region102: #{swe_gnn_processor.1} parent=5 // pred_check
        _
      $region103: #{swe_gnn_processor.1} parent=5 // pred_check_branch
        %445 = sbr.rel (%p442) target = $region105
      $region104: #{swe_gnn_processor.1} parent=5 // pred_region
        %s446 = ssub.s32 %s19, 1
        %s447 = sand.u32 %s117, 1
        %s448 = sand.u32 %s117, 1
        %s449 = smul.addr %s448, 8
        %s450 = scalar_lea.vmem [#allocation4], %s449
        // Predicated region
        $region106: #{swe_gnn_processor.1} parent=104 // pred_check
          %p451 = pneg %p130
        $region107: #{swe_gnn_processor.1} parent=104 // pred_check_branch
          %453 = sbr.rel (%p451) target = $region109
        $region108: #{swe_gnn_processor.1} parent=104 // pred_region
          _
        $region109: #{swe_gnn_processor.1} parent=104 // pred_fallthru
          _
        %p454 = pneg %p52
        %p455 = pneg %p49
        %p456 = scmp.lt.s32.totalorder %s29, 1
        %s457 = scalar_select %p456, %s29, 1
        %s458 = scalar_lea.vmem %s1, %s457
        %p459 = pneg %p78
        %p460 = pneg %p75
        %p461 = scmp.lt.s32.totalorder %s29, 1
        %s462 = scalar_select %p461, %s29, 1
        %s463 = scalar_lea.vmem %s2, %s462
        %p464 = pneg %p104
        %p465 = pneg %p101
        %s466 = sand.u32 %s117, 1
        %s467 = sand.u32 %s117, 1
        %s468 = smul.addr %s467, 8
        %s469 = scalar_lea.vmem [#allocation4], %s468
        %p470 = pneg %p130
        %p471 = pneg %p127
        %p472 = pneg %p151
        %p473 = pneg %p148
        %p474 = pneg %p172
        %p475 = pneg %p169
        %p476 = pneg %p193
        %p477 = pneg %p190
        %p478 = pneg %p214
        %p479 = pneg %p211
        %p480 = pneg %p235
        %p481 = pneg %p232
        %p482 = pneg %p256
        %p483 = pneg %p253
        %p484 = scmp.lt.s32.totalorder %s28, 7
        %s485 = scalar_select %p484, %s28, 7
        %s486 = smul.addr %s485, 4
        %s487 = scalar_lea.vmem %s10, %s486
        %p488 = pneg %p282
        %p489 = pneg %p279
        %p490 = pneg %p303
        %p491 = pneg %p300
        %p492 = pneg %p324
        %p493 = pneg %p321
        %p494 = scmp.lt.s32.totalorder %s29, 1
        %s495 = scalar_select %p494, %s29, 1
        %s496 = scalar_lea.vmem %s1, %s495
        %p497 = scmp.lt.s32.totalorder %s29, 1
        %s498 = scalar_select %p497, %s29, 1
        %s499 = scalar_lea.vmem %s2, %s498
        %p500 = scmp.lt.s32.totalorder %s28, 7
        %s501 = scalar_select %p500, %s28, 7
        %s502 = smul.addr %s501, 4
        %s503 = scalar_lea.vmem %s10, %s502
        %p505 = scmp.eq.s32.totalorder %s28, 0
        %p506 = scmp.eq.s32.totalorder %s29, 0
        %p507 = pnand %p505, %p506
        %p508 = pneg %p507
        // Predicated region
        $region110: #{swe_gnn_processor.1} parent=104 // pred_check
          _
        $region111: #{swe_gnn_processor.1} parent=104 // pred_check_branch
          %510 = sbr.rel (%p507) target = $region113
        $region112: #{swe_gnn_processor.1} parent=104 // pred_region
          %v511 = vld [vmem:[%s0] sm:$0xff]
          %v512 = vld [vmem:[%s0 + $0x8] sm:$0x1]
          %vm513 = vcmask 261120
          %514 = vst.msk [vmem:[%s12] sm:$0xff] %vm513, %v511
          %vm515 = vcmask 253952
          %516 = vst.msk [vmem:[%s12 + $0x8] sm:$0x1] %vm515, %v512
        $region113: #{swe_gnn_processor.1} parent=104 // pred_fallthru
          _
        // Predicated region
        $region114: #{swe_gnn_processor.1} parent=104 // pred_check
          %p517 = pneg %p506
        $region115: #{swe_gnn_processor.1} parent=104 // pred_check_branch
          %519 = sbr.rel (%p517) target = $region117
        $region116: #{swe_gnn_processor.1} parent=104 // pred_region
          %v520 = vld [vmem:[%s12] sm:$0xff]
          %vm521 = vcmask 261120
          %v522 = vsel %vm521, %v520, 0.0
          %v523 = vrot.slane %v522, 4
          %v524 = vadd.f32 %v522, %v523
          %v525 = vrot.slane %v524, 2
          %v526 = vadd.f32 %v524, %v525
          %v527 = vrot.slane %v526, 1
          %v528 = vadd.f32 %v526, %v527
          %vm529 = vcmp.ne.f32.partialorder %v528, 0.0
          %v530 = vsel %vm529, 1, 0
          %v531 = vcvt.s32.f32 %v530
          %vm532 = vcmask 253952
          %533 = vst.msk [vmem:[%s12 + $0x8] sm:$0x1] %vm532, %v531
          %534 = vst.msk [vmem:[#allocation2] sm:$0xff] %vm521, 0.0
        $region117: #{swe_gnn_processor.1} parent=104 // pred_fallthru
          _
        %v535 = vld [vmem:[%s496] sm:$0x1]
        %v536 = vld [vmem:[%s499] sm:$0x1]
        %v537 = vlaneseq
        %v538 = vshrl.u32 %v537, 7
        %v539 = vadd.s32 %v538, 8
        %v540 = vadd.s32 %v538, 16
        %v541 = vadd.s32 %v538, 24
        %v542 = vlaneseq
        %v543 = vshrl.u32 %v542, 7
        %v544 = vsub.s32 0, %v543
        %v545 = vrot.slane %v535, %v544
        %v546 = vlaneseq
        %v547 = vshrl.u32 %v546, 7
        %v548 = vsub.s32 0, %v547
        %v549 = vrot.slane %v536, %v548
        %vm550 = vcmp.eq.s32.totalorder %v538, %v545
        %vm551 = vcmp.eq.s32.totalorder %v538, %v549
        %vm552 = vcmp.eq.s32.totalorder %v539, %v545
        %vm553 = vcmp.eq.s32.totalorder %v539, %v549
        %vm554 = vcmp.eq.s32.totalorder %v540, %v545
        %vm555 = vcmp.eq.s32.totalorder %v540, %v549
        %vm556 = vcmp.eq.s32.totalorder %v541, %v545
        %vm557 = vcmp.eq.s32.totalorder %v541, %v549
        %v558 = vsel %vm550, 1, 0
        %v559 = vsel %vm551, 1, 0
        %v560 = vsel %vm552, 1, 0
        %v561 = vsel %vm553, 1, 0
        %v562 = vsel %vm554, 1, 0
        %v563 = vsel %vm555, 1, 0
        %v564 = vsel %vm556, 1, 0
        %v565 = vsel %vm557, 1, 0
        %v566 = vcvt.s32.f32 %v558
        %v567 = vcvt.s32.f32 %v559
        %v568 = vcvt.s32.f32 %v560
        %v569 = vcvt.s32.f32 %v561
        %v570 = vcvt.s32.f32 %v562
        %v571 = vcvt.s32.f32 %v563
        %v572 = vcvt.s32.f32 %v564
        %v573 = vcvt.s32.f32 %v565
        %v574 = vpack.c.bf16 %v568, %v566
        %v575 = vpack.c.bf16 %v569, %v567
        %v576 = vpack.c.bf16 %v572, %v570
        %v577 = vpack.c.bf16 %v573, %v571
        %v578 = vld [vmem:[%s12] sm:$0xff]
        %v579 = vld [vmem:[%s12 + $0x8] sm:$0x1]
        %v580 = vpack.c.bf16 %v579, %v578
        %vm581 = vcmask 261120
        %v583 = vsel %vm581, %v580, 0
        %585 = vmatprep.subr.bf16.mxu0 0
        %586 = vmatpush1.bf16.msra.mxu0 0
        %587 = vmatprep.subr.bf16.mxu0 0
        %588 = vmatpush1.bf16.msra.mxu0 0
        %589 = vmatprep.subr.bf16.mxu0 0
        %590 = vmatpush1.bf16.msra.mxu0 0
        %591 = vmatprep.subr.bf16.mxu0 0
        %592 = vmatpush1.bf16.msra.mxu0 0
        %593 = vmatprep.subr.bf16.mxu0 0
        %594 = vmatpush1.bf16.msra.mxu0 0
        %595 = vmatprep.subr.bf16.mxu0 0
        %596 = vmatpush1.bf16.msra.mxu0 0
        %597 = vmatprep.subr.bf16.mxu0 %v577
        %598 = vmatpush1.bf16.msra.mxu0 %v576
        %599 = vmatprep.subr.bf16.mxu0 %v575
        %600 = vmatpush1.bf16.msra.mxu0 %v574
        %601 = vmatprep.subr.bf16.mxu0 0
        %602 = vmatpush2.bf16.msra.mxu0 0
        %603 = vmatprep.subr.bf16.mxu0 0
        %604 = vmatpush2.bf16.msra.mxu0 0
        %605 = vmatprep.subr.bf16.mxu0 0
        %606 = vmatpush2.bf16.msra.mxu0 0
        %607 = vmatprep.subr.bf16.mxu0 0
        %608 = vmatpush2.bf16.msra.mxu0 0
        %609 = vmatprep.subr.bf16.mxu0 0
        %610 = vmatpush2.bf16.msra.mxu0 0
        %611 = vmatprep.subr.bf16.mxu0 0
        %612 = vmatpush2.bf16.msra.mxu0 0
        %613 = vmatprep.subr.bf16.mxu0 0
        %614 = vmatpush2.bf16.msra.mxu0 0
        %615 = vmatprep.subr.bf16.mxu0 0
        %616 = vmatpush2.bf16.msra.mxu0 0
        %617 = vmatprep.mubr.bf16.mxu0 0
        %618 = vmatmul.mubr.bf16.gmra.mxu0 %v583
        %v619 = vpop.f32.mrf.mxu0
        %v620 = vadd.f32 0.0, %v619
        %v621 = vpop.f32.mrf.mxu0
        %v622 = vadd.f32 0.0, %v621
        %v623 = vpop.f32.mrf.mxu0
        %v624 = vadd.f32 0.0, %v623
        %v625 = vpop.f32.mrf.mxu0
        %v626 = vadd.f32 0.0, %v625
        %627 = vdwg.mxu0
        %v628 = vld [vmem:[%s4] sm:$0xf]
        %v629 = vld [vmem:[%s4 + $0x4] sm:$0xf]
        %v630 = vld [vmem:[%s450] sm:$0xf]
        %v631 = vld [vmem:[%s450 + $0x4] sm:$0x3]
        %v632 = vld [vmem:[%s5] sm:$0xf]
        %v633 = vld [vmem:[%s5 + $0x4] sm:$0xf]
        %v634 = vpack.c.bf16 %v620, %v620
        %v637 = vunpack.c.l.b16 %v632
        %v638 = vunpack.c.l.b16 %v633
        %v639 = vpack.c.b16 %v638, %v637
        %vm640 = vcmask 64512
        %v642 = vsel %vm640, %v639, 0
        %vm644 = vcmask 1043456
        %v646 = vsel %vm644, %v634, 0
        %648 = vmatprep.subr.bf16.mxu0 0
        %649 = vmatpush1.bf16.msra.mxu0 0
        %650 = vmatprep.subr.bf16.mxu0 0
        %651 = vmatpush1.bf16.msra.mxu0 0
        %652 = vmatprep.subr.bf16.mxu0 0
        %653 = vmatpush1.bf16.msra.mxu0 0
        %654 = vmatprep.subr.bf16.mxu0 0
        %655 = vmatpush1.bf16.msra.mxu0 0
        %656 = vmatprep.subr.bf16.mxu0 0
        %657 = vmatpush1.bf16.msra.mxu0 0
        %658 = vmatprep.subr.bf16.mxu0 0
        %659 = vmatpush1.bf16.msra.mxu0 0
        %660 = vmatprep.subr.bf16.mxu0 0
        %661 = vmatpush1.bf16.msra.mxu0 0
        %662 = vmatprep.subr.bf16.mxu0 0
        %663 = vmatpush1.bf16.msra.mxu0 %v646
        %664 = vmatprep.subr.bf16.mxu0 0
        %665 = vmatpush2.bf16.msra.mxu0 0
        %666 = vmatprep.subr.bf16.mxu0 0
        %667 = vmatpush2.bf16.msra.mxu0 0
        %668 = vmatprep.subr.bf16.mxu0 0
        %669 = vmatpush2.bf16.msra.mxu0 0
        %670 = vmatprep.subr.bf16.mxu0 0
        %671 = vmatpush2.bf16.msra.mxu0 0
        %672 = vmatprep.subr.bf16.mxu0 0
        %673 = vmatpush2.bf16.msra.mxu0 0
        %674 = vmatprep.subr.bf16.mxu0 0
        %675 = vmatpush2.bf16.msra.mxu0 0
        %676 = vmatprep.subr.bf16.mxu0 0
        %677 = vmatpush2.bf16.msra.mxu0 0
        %678 = vmatprep.subr.bf16.mxu0 0
        %679 = vmatpush2.bf16.msra.mxu0 0
        %680 = vmatprep.mubr.bf16.mxu0 0
        %681 = vmatmul.mubr.bf16.gmra.mxu0 %v642
        %v682 = vpop.f32.mrf.mxu0
        %v683 = vadd.f32 0.0, %v682
        %v684 = vpop.f32.mrf.mxu0
        %v685 = vpop.f32.mrf.mxu0
        %v686 = vadd.f32 0.0, %v685
        %v687 = vpop.f32.mrf.mxu0
        %688 = vdwg.mxu0
        %v691 = vunpack.c.l.b16 %v628
        %v692 = vunpack.c.l.b16 %v629
        %v693 = vpack.c.b16 %v692, %v691
        %v696 = vunpack.c.l.b16 %v630
        %v697 = vunpack.c.l.b16 %v631
        %v698 = vpack.c.b16 %v697, %v696
        %vm699 = vcmask 97280
        %v701 = vsel %vm699, %v693, 0
        %vm703 = vcmask 1045504
        %v705 = vsel %vm703, %v698, 0
        %707 = vmatprep.subr.bf16.mxu0 0
        %708 = vmatpush1.bf16.msra.mxu0 0
        %709 = vmatprep.subr.bf16.mxu0 0
        %710 = vmatpush1.bf16.msra.mxu0 0
        %711 = vmatprep.subr.bf16.mxu0 0
        %712 = vmatpush1.bf16.msra.mxu0 0
        %713 = vmatprep.subr.bf16.mxu0 0
        %714 = vmatpush1.bf16.msra.mxu0 0
        %715 = vmatprep.subr.bf16.mxu0 0
        %716 = vmatpush1.bf16.msra.mxu0 0
        %717 = vmatprep.subr.bf16.mxu0 0
        %718 = vmatpush1.bf16.msra.mxu0 0
        %719 = vmatprep.subr.bf16.mxu0 0
        %720 = vmatpush1.bf16.msra.mxu0 0
        %721 = vmatprep.subr.bf16.mxu0 0
        %722 = vmatpush1.bf16.msra.mxu0 %v705
        %723 = vmatprep.subr.bf16.mxu0 0
        %724 = vmatpush2.bf16.msra.mxu0 0
        %725 = vmatprep.subr.bf16.mxu0 0
        %726 = vmatpush2.bf16.msra.mxu0 0
        %727 = vmatprep.subr.bf16.mxu0 0
        %728 = vmatpush2.bf16.msra.mxu0 0
        %729 = vmatprep.subr.bf16.mxu0 0
        %730 = vmatpush2.bf16.msra.mxu0 0
        %731 = vmatprep.subr.bf16.mxu0 0
        %732 = vmatpush2.bf16.msra.mxu0 0
        %733 = vmatprep.subr.bf16.mxu0 0
        %734 = vmatpush2.bf16.msra.mxu0 0
        %735 = vmatprep.subr.bf16.mxu0 0
        %736 = vmatpush2.bf16.msra.mxu0 0
        %737 = vmatprep.subr.bf16.mxu0 0
        %738 = vmatpush2.bf16.msra.mxu0 0
        %739 = vmatprep.mubr.bf16.mxu0 0
        %740 = vmatmul.mubr.bf16.gmra.mxu0 %v701
        %v741 = vpop.f32.mrf.mxu0
        %v742 = vadd.f32 %v683, %v741
        %v743 = vpop.f32.mrf.mxu0
        %v744 = vpop.f32.mrf.mxu0
        %v745 = vadd.f32 %v686, %v744
        %v746 = vpop.f32.mrf.mxu0
        %747 = vdwg.mxu0
        %v748 = vld [vmem:[%s6] sm:$0xf]
        %v749 = vld [vmem:[%s6 + $0x4] sm:$0xf]
        %v750 = vpack.c.bf16 %v622, %v622
        %v753 = vunpack.c.l.b16 %v748
        %v754 = vunpack.c.l.b16 %v749
        %v755 = vpack.c.b16 %v754, %v753
        %v757 = vsel %vm640, %v755, 0
        %v760 = vsel %vm644, %v750, 0
        %762 = vmatprep.subr.bf16.mxu0 0
        %763 = vmatpush1.bf16.msra.mxu0 0
        %764 = vmatprep.subr.bf16.mxu0 0
        %765 = vmatpush1.bf16.msra.mxu0 0
        %766 = vmatprep.subr.bf16.mxu0 0
        %767 = vmatpush1.bf16.msra.mxu0 0
        %768 = vmatprep.subr.bf16.mxu0 0
        %769 = vmatpush1.bf16.msra.mxu0 0
        %770 = vmatprep.subr.bf16.mxu0 0
        %771 = vmatpush1.bf16.msra.mxu0 0
        %772 = vmatprep.subr.bf16.mxu0 0
        %773 = vmatpush1.bf16.msra.mxu0 0
        %774 = vmatprep.subr.bf16.mxu0 0
        %775 = vmatpush1.bf16.msra.mxu0 0
        %776 = vmatprep.subr.bf16.mxu0 0
        %777 = vmatpush1.bf16.msra.mxu0 %v760
        %778 = vmatprep.subr.bf16.mxu0 0
        %779 = vmatpush2.bf16.msra.mxu0 0
        %780 = vmatprep.subr.bf16.mxu0 0
        %781 = vmatpush2.bf16.msra.mxu0 0
        %782 = vmatprep.subr.bf16.mxu0 0
        %783 = vmatpush2.bf16.msra.mxu0 0
        %784 = vmatprep.subr.bf16.mxu0 0
        %785 = vmatpush2.bf16.msra.mxu0 0
        %786 = vmatprep.subr.bf16.mxu0 0
        %787 = vmatpush2.bf16.msra.mxu0 0
        %788 = vmatprep.subr.bf16.mxu0 0
        %789 = vmatpush2.bf16.msra.mxu0 0
        %790 = vmatprep.subr.bf16.mxu0 0
        %791 = vmatpush2.bf16.msra.mxu0 0
        %792 = vmatprep.subr.bf16.mxu0 0
        %793 = vmatpush2.bf16.msra.mxu0 0
        %794 = vmatprep.mubr.bf16.mxu0 0
        %795 = vmatmul.mubr.bf16.gmra.mxu0 %v757
        %v796 = vpop.f32.mrf.mxu0
        %v797 = vadd.f32 0.0, %v796
        %v798 = vpop.f32.mrf.mxu0
        %v799 = vpop.f32.mrf.mxu0
        %v800 = vadd.f32 0.0, %v799
        %v801 = vpop.f32.mrf.mxu0
        %802 = vdwg.mxu0
        %v803 = vadd.f32 %v742, %v797
        %v804 = vadd.f32 %v745, %v800
        %v805 = vld [vmem:[%s7] sm:$0xff]
        %v806 = vld [vmem:[%s7 + $0x8] sm:$0xff]
        %808 = vset.pattern.permute.xlu0 0
        %809 = vperm.xlu0 %808, %v805
        %v810 = vpop.permute.xlu0 %809
        %813 = vset.pattern.permute.xlu0 0
        %814 = vperm.xlu0 %813, %v806
        %v815 = vpop.permute.xlu0 %814
        %v817 = vadd.f32 %v803, %v810
        %v818 = vadd.f32 %v804, %v815
        %s819 = sld [smem:[#allocation3]]
        %vm820 = vcmp.ge.f32.partialorder %v817, 0.0
        %vm821 = vcmp.ge.f32.partialorder %v818, 0.0
        %v822 = vstv %s819
        %v823 = vmul.f32 %v822, %v817
        %v824 = vmul.f32 %v822, %v818
        %v825 = vsel %vm820, %v817, %v823
        %v826 = vsel %vm821, %v818, %v824
        %v827 = vld [vmem:[%s8] sm:$0xf]
        %v828 = vpack.c.bf16 %v826, %v825
        %v829 = vld [vmem:[%s9] sm:$0xff]
        %831 = vset.pattern.permute.xlu0 0
        %832 = vperm.xlu0 %831, %v829
        %v833 = vpop.permute.xlu0 %832
        %vm835 = vcmask 130048
        %v837 = vsel %vm835, %v827, 0
        %839 = vmatprep.subr.bf16.mxu0 0
        %840 = vmatpush1.bf16.msra.mxu0 0
        %841 = vmatprep.subr.bf16.mxu0 0
        %842 = vmatpush1.bf16.msra.mxu0 0
        %843 = vmatprep.subr.bf16.mxu0 0
        %844 = vmatpush1.bf16.msra.mxu0 0
        %845 = vmatprep.subr.bf16.mxu0 0
        %846 = vmatpush1.bf16.msra.mxu0 0
        %847 = vmatprep.subr.bf16.mxu0 0
        %848 = vmatpush1.bf16.msra.mxu0 0
        %849 = vmatprep.subr.bf16.mxu0 0
        %850 = vmatpush1.bf16.msra.mxu0 0
        %851 = vmatprep.subr.bf16.mxu0 0
        %852 = vmatpush1.bf16.msra.mxu0 0
        %853 = vmatprep.subr.bf16.mxu0 0
        %854 = vmatpush1.bf16.msra.mxu0 %v828
        %855 = vmatprep.subr.bf16.mxu0 0
        %856 = vmatpush2.bf16.msra.mxu0 0
        %857 = vmatprep.subr.bf16.mxu0 0
        %858 = vmatpush2.bf16.msra.mxu0 0
        %859 = vmatprep.subr.bf16.mxu0 0
        %860 = vmatpush2.bf16.msra.mxu0 0
        %861 = vmatprep.subr.bf16.mxu0 0
        %862 = vmatpush2.bf16.msra.mxu0 0
        %863 = vmatprep.subr.bf16.mxu0 0
        %864 = vmatpush2.bf16.msra.mxu0 0
        %865 = vmatprep.subr.bf16.mxu0 0
        %866 = vmatpush2.bf16.msra.mxu0 0
        %867 = vmatprep.subr.bf16.mxu0 0
        %868 = vmatpush2.bf16.msra.mxu0 0
        %869 = vmatprep.subr.bf16.mxu0 0
        %870 = vmatpush2.bf16.msra.mxu0 0
        %871 = vmatprep.mubr.bf16.mxu0 0
        %872 = vmatmul.mubr.bf16.gmra.mxu0 %v837
        %v873 = vpop.f32.mrf.mxu0
        %v874 = vadd.f32 %v833, %v873
        %v875 = vpop.f32.mrf.mxu0
        %v876 = vpop.f32.mrf.mxu0
        %v877 = vpop.f32.mrf.mxu0
        %878 = vdwg.mxu0
        %v879 = vmul.f32 %v874, %v874
        %v880 = vrot.slane %v879, 4
        %v881 = vadd.f32 %v879, %v880
        %v882 = vrot.slane %v881, 2
        %v883 = vadd.f32 %v881, %v882
        %v884 = vrot.slane %v883, 1
        %v885 = vadd.f32 %v883, %v884
        %vm886 = vcmp.gt.f32.partialorder %v885, 0.0
        %v887 = vadd.f32 %v624, %v626
        %vm888 = vcmp.gt.f32.partialorder %v887, 0.0
        %vm889 = vmand %vm886, %vm888
        %v890 = vrsqrt.pop %v885
        %v891 = vsel %vm889, %v890, 0.0
        %v892 = vsub.f32 %v622, %v620
        %v893 = vmul.f32 %v892, %v874
        %v894 = vlaneseq
        %v895 = vshrl.u32 %v894, 7
        %v896 = vsub.s32 0, %v895
        %v897 = vrot.slane %v891, %v896
        %v898 = vmul.f32 %v893, %v897
        %v899 = vld [vmem:[#allocation2] sm:$0xff]
        %v900 = vpack.c.bf16 %v898, %v898
        %901 = vmatprep.subr.bf16.mxu0 0
        %902 = vmatpush1.bf16.xpose.msra.mxu0 0
        %903 = vmatprep.subr.bf16.mxu0 0
        %904 = vmatpush1.bf16.xpose.msra.mxu0 0
        %905 = vmatprep.subr.bf16.mxu0 0
        %906 = vmatpush1.bf16.xpose.msra.mxu0 0
        %907 = vmatprep.subr.bf16.mxu0 0
        %908 = vmatpush1.bf16.xpose.msra.mxu0 0
        %909 = vmatprep.subr.bf16.mxu0 0
        %910 = vmatpush1.bf16.xpose.msra.mxu0 0
        %911 = vmatprep.subr.bf16.mxu0 0
        %912 = vmatpush1.bf16.xpose.msra.mxu0 0
        %913 = vmatprep.subr.bf16.mxu0 0
        %914 = vmatpush1.bf16.xpose.msra.mxu0 %v577
        %915 = vmatprep.subr.bf16.mxu0 0
        %916 = vmatpush1.bf16.xpose.msra.mxu0 %v575
        %917 = vmatprep.subr.bf16.mxu0 0
        %918 = vmatpush2.bf16.xpose.msra.mxu0 0
        %919 = vmatprep.subr.bf16.mxu0 0
        %920 = vmatpush2.bf16.xpose.msra.mxu0 0
        %921 = vmatprep.subr.bf16.mxu0 0
        %922 = vmatpush2.bf16.xpose.msra.mxu0 0
        %923 = vmatprep.subr.bf16.mxu0 0
        %924 = vmatpush2.bf16.xpose.msra.mxu0 0
        %925 = vmatprep.subr.bf16.mxu0 0
        %926 = vmatpush2.bf16.xpose.msra.mxu0 0
        %927 = vmatprep.subr.bf16.mxu0 0
        %928 = vmatpush2.bf16.xpose.msra.mxu0 0
        %929 = vmatprep.subr.bf16.mxu0 0
        %930 = vmatpush2.bf16.xpose.msra.mxu0 0
        %931 = vmatprep.subr.bf16.mxu0 0
        %932 = vmatpush2.bf16.xpose.msra.mxu0 0
        %933 = vmatprep.mubr.bf16.mxu0 0
        %934 = vmatmul.mubr.bf16.gmra.mxu0 %v900
        %v935 = vpop.f32.mrf.mxu0
        %v936 = vadd.f32 0.0, %v935
        %v937 = vpop.f32.mrf.mxu0
        %v938 = vpop.f32.mrf.mxu0
        %v939 = vpop.f32.mrf.mxu0
        %940 = vdwg.mxu0
        %v941 = vadd.f32 %v899, %v936
        %942 = vst.msk [vmem:[#allocation2] sm:$0xff] %vm581, %v941
        %p943 = scmp.eq.s32.totalorder %s29, 1
        // Predicated region
        $region118: #{swe_gnn_processor.1} parent=104 // pred_check
          %p944 = pneg %p943
        $region119: #{swe_gnn_processor.1} parent=104 // pred_check_branch
          %946 = sbr.rel (%p944) target = $region121
        $region120: #{swe_gnn_processor.1} parent=104 // pred_region
          %v947 = vld [vmem:[%s503] sm:$0xf]
          %v948 = vld [vmem:[#allocation2] sm:$0xff]
          %v949 = vpack.c.bf16 %v948, %v948
          %v951 = vsel %vm640, %v947, 0
          %v954 = vsel %vm644, %v949, 0
          %956 = vmatprep.subr.bf16.mxu0 0
          %957 = vmatpush1.bf16.msra.mxu0 0
          %958 = vmatprep.subr.bf16.mxu0 0
          %959 = vmatpush1.bf16.msra.mxu0 0
          %960 = vmatprep.subr.bf16.mxu0 0
          %961 = vmatpush1.bf16.msra.mxu0 0
          %962 = vmatprep.subr.bf16.mxu0 0
          %963 = vmatpush1.bf16.msra.mxu0 0
          %964 = vmatprep.subr.bf16.mxu0 0
          %965 = vmatpush1.bf16.msra.mxu0 0
          %966 = vmatprep.subr.bf16.mxu0 0
          %967 = vmatpush1.bf16.msra.mxu0 0
          %968 = vmatprep.subr.bf16.mxu0 0
          %969 = vmatpush1.bf16.msra.mxu0 0
          %970 = vmatprep.subr.bf16.mxu0 0
          %971 = vmatpush1.bf16.msra.mxu0 %v954
          %972 = vmatprep.subr.bf16.mxu0 0
          %973 = vmatpush2.bf16.msra.mxu0 0
          %974 = vmatprep.subr.bf16.mxu0 0
          %975 = vmatpush2.bf16.msra.mxu0 0
          %976 = vmatprep.subr.bf16.mxu0 0
          %977 = vmatpush2.bf16.msra.mxu0 0
          %978 = vmatprep.subr.bf16.mxu0 0
          %979 = vmatpush2.bf16.msra.mxu0 0
          %980 = vmatprep.subr.bf16.mxu0 0
          %981 = vmatpush2.bf16.msra.mxu0 0
          %982 = vmatprep.subr.bf16.mxu0 0
          %983 = vmatpush2.bf16.msra.mxu0 0
          %984 = vmatprep.subr.bf16.mxu0 0
          %985 = vmatpush2.bf16.msra.mxu0 0
          %986 = vmatprep.subr.bf16.mxu0 0
          %987 = vmatpush2.bf16.msra.mxu0 0
          %988 = vmatprep.mubr.bf16.mxu0 0
          %989 = vmatmul.mubr.bf16.gmra.mxu0 %v951
          %v990 = vpop.f32.mrf.mxu0
          %v991 = vadd.f32 0.0, %v990
          %v992 = vpop.f32.mrf.mxu0
          %v993 = vpop.f32.mrf.mxu0
          %v994 = vpop.f32.mrf.mxu0
          %995 = vdwg.mxu0
          %v996 = vld [vmem:[%s12] sm:$0xff]
          %v997 = vadd.f32 %v996, %v991
          %998 = vst.msk [vmem:[%s12] sm:$0xff] %vm581, %v997
        $region121: #{swe_gnn_processor.1} parent=104 // pred_fallthru
          _
        // Predicated region
        $region122: #{swe_gnn_processor.1} parent=104 // pred_check
          %p999 = pneg %p321
        $region123: #{swe_gnn_processor.1} parent=104 // pred_check_branch
          %1001 = sbr.rel (%p999) target = $region125
        $region124: #{swe_gnn_processor.1} parent=104 // pred_region
          _
        $region125: #{swe_gnn_processor.1} parent=104 // pred_fallthru
          _
        // Predicated region
        $region126: #{swe_gnn_processor.1} parent=104 // pred_check
          %p1002 = pneg %p321
        $region127: #{swe_gnn_processor.1} parent=104 // pred_check_branch
          %1004 = sbr.rel (%p1002) target = $region129
        $region128: #{swe_gnn_processor.1} parent=104 // pred_region
          _
        $region129: #{swe_gnn_processor.1} parent=104 // pred_fallthru
          _
      $region105: #{swe_gnn_processor.1} parent=5 // pred_fallthru
        _
      %p1005 = scmp.le.s32.totalorder 2, %s19
      // Predicated region
      $region130: #{swe_gnn_processor.1} parent=5 // pred_check
        %p1006 = pneg %p1005
      $region131: #{swe_gnn_processor.1} parent=5 // pred_check_branch
        %1008 = sbr.rel (%p1006) target = $region133
      $region132: #{swe_gnn_processor.1} parent=5 // pred_region
        %s1009 = ssub.s32 %s19, 2
      $region133: #{swe_gnn_processor.1} parent=5 // pred_fallthru
        _
    $region6: #{swe_gnn_processor.1} parent=1 // loop_footer
      %s23 = sadd.s32 1, %s19
    $region7: #{swe_gnn_processor.1} parent=1 // loop_footer_branch
      %18 = sbr.rel target = $region3
    $region8: #{swe_gnn_processor.1} parent=1 // loop_exit
      _

</llo_original>
